<compile_context>
chip_gen: v6e
topology: v6e:2x2x1
jax: 0.10.0
libtpu: 0.0.40
codegen_flags: <defaults>
</compile_context>

<pallas_src>
import functools

import jax
import jax.numpy as jnp
from jax.experimental import pallas as pl
from jax.experimental.pallas import tpu as pltpu

_VMEM_LIMIT = 32 * 1024 * 1024  # raise scoped VMEM; safe on v5e/v6e/v7x


def _silu(y):
    # exp + approx reciprocal both live on the EUP slot -> frees VALU slots.
    return y * pl.reciprocal(1.0 + jnp.exp(-y), approx=True)


def _leaky(y):
    return jnp.where(y > 0, y, 0.1 * y)


# ----------------------------------------------------------------------------
# Kernel A: 1x1 conv + BN + SiLU   (bf16 matmul, f32 epilogue)
# ----------------------------------------------------------------------------
def _pw_kernel(x_ref, w_ref, s_ref, b_ref, o_ref):
    y = jnp.dot(x_ref[...], w_ref[...], preferred_element_type=jnp.float32)
    y = y * s_ref[...] + b_ref[...]
    y = _silu(y)
    o_ref[...] = y.astype(o_ref.dtype)


def pointwise_conv_bn_silu(x2d, w, scale, bias, *, tm=512,
                           out_dtype=jnp.bfloat16):
    """x2d: (M, Cin) bf16, w: (Cin, Cout) bf16 -> (M, Cout) out_dtype."""
    M, cin = x2d.shape
    cout = w.shape[1]
    tm = min(tm, M)
    Mp = M
    if M % tm:  # fallback only; test shapes divide evenly
        Mp = ((M + tm - 1) // tm) * tm
        x2d = jnp.pad(x2d, ((0, Mp - M), (0, 0)))
    out = pl.pallas_call(
        _pw_kernel,
        out_shape=jax.ShapeDtypeStruct((Mp, cout), out_dtype),
        grid=(Mp // tm,),
        in_specs=[
            pl.BlockSpec((tm, cin), lambda i: (i, 0)),     # activation tile
            pl.BlockSpec((cin, cout), lambda i: (0, 0)),   # weight (resident)
            pl.BlockSpec((1, cout), lambda i: (0, 0)),     # bn scale
            pl.BlockSpec((1, cout), lambda i: (0, 0)),     # bn bias
        ],
        out_specs=pl.BlockSpec((tm, cout), lambda i: (i, 0)),
        compiler_params=pltpu.CompilerParams(
            dimension_semantics=("parallel",),
            vmem_limit_bytes=_VMEM_LIMIT),
    )(x2d, w,
      scale.reshape(1, -1).astype(jnp.float32),
      bias.reshape(1, -1).astype(jnp.float32))
    return out[:M] if Mp != M else out


# ----------------------------------------------------------------------------
# Kernel B: 3x3 conv (pad 1, stride 1) + BN + SiLU (+ residual), no im2col.
# Grid over batch; 9 shifted bf16 matmuls accumulate into an f32 register acc.
# ----------------------------------------------------------------------------
def _conv3x3_kernel(x_ref, w_ref, s_ref, b_ref, *rest, H, W, add_residual):
    if add_residual:
        r_ref, o_ref = rest
    else:
        (o_ref,) = rest
    C = x_ref.shape[-1]
    cout = w_ref.shape[-1]
    acc = jnp.zeros((H * W, cout), jnp.float32)
    for kh in range(3):
        for kw in range(3):
            xs = x_ref[0, kh:kh + H, kw:kw + W, :].reshape(H * W, C)  # bf16
            acc = acc + jnp.dot(xs, w_ref[kh * 3 + kw],
                                preferred_element_type=jnp.float32)
    y = acc * s_ref[...] + b_ref[...]
    y = _silu(y)
    if add_residual:
        y = y + r_ref[0].reshape(H * W, cout).astype(jnp.float32)
    o_ref[...] = y.reshape(1, H, W, cout).astype(o_ref.dtype)


def conv3x3_bn_silu(x_pad, w9, scale, bias, residual=None,
                    out_dtype=jnp.bfloat16):
    """x_pad: (N, H+2, W+2, C) bf16; w9: (9, C, Cout) bf16 (tap = kh*3+kw)."""
    n, hp2, wp2, c = x_pad.shape
    H, W = hp2 - 2, wp2 - 2
    cout = w9.shape[2]
    add_res = residual is not None
    kernel = functools.partial(_conv3x3_kernel, H=H, W=W,
                               add_residual=add_res)
    in_specs = [
        pl.BlockSpec((1, hp2, wp2, c), lambda b: (b, 0, 0, 0)),  # padded image
        pl.BlockSpec((9, c, cout), lambda b: (0, 0, 0)),         # 3x3 weights
        pl.BlockSpec((1, cout), lambda b: (0, 0)),               # bn scale
        pl.BlockSpec((1, cout), lambda b: (0, 0)),               # bn bias
    ]
    args = [x_pad, w9,
            scale.reshape(1, -1).astype(jnp.float32),
            bias.reshape(1, -1).astype(jnp.float32)]
    if add_res:
        in_specs.append(pl.BlockSpec((1, H, W, cout),
                                     lambda b: (b, 0, 0, 0)))
        args.append(residual)
    return pl.pallas_call(
        kernel,
        out_shape=jax.ShapeDtypeStruct((n, H, W, cout), out_dtype),
        grid=(n,),
        in_specs=in_specs,
        out_specs=pl.BlockSpec((1, H, W, cout), lambda b: (b, 0, 0, 0)),
        compiler_params=pltpu.CompilerParams(
            dimension_semantics=("parallel",),
            vmem_limit_bytes=_VMEM_LIMIT),
    )(*args)


# ----------------------------------------------------------------------------
# Kernel C: fused CSP tail
#   out = SiLU(BN4( leaky(BN_top(y @ cv3_w)) @ W4_top
#                 + leaky(BN_bot(x @ cv2_w)) @ W4_bot ))
# (replaces y1/y2/concat/cv4 = three calls + one concatenate)
# ----------------------------------------------------------------------------
def _csp_tail_kernel(y_ref, x_ref, w3_ref, w2_ref, st_ref, bt_ref, sb_ref,
                     bb_ref, w4t_ref, w4b_ref, s4_ref, b4_ref, o_ref):
    f32 = jnp.float32
    y1 = jnp.dot(y_ref[...], w3_ref[...], preferred_element_type=f32)
    a1 = _leaky(y1 * st_ref[...] + bt_ref[...])
    y2 = jnp.dot(x_ref[...], w2_ref[...], preferred_element_type=f32)
    a2 = _leaky(y2 * sb_ref[...] + bb_ref[...])
    z = jnp.dot(a1.astype(jnp.bfloat16), w4t_ref[...],
                preferred_element_type=f32)
    z = z + jnp.dot(a2.astype(jnp.bfloat16), w4b_ref[...],
                    preferred_element_type=f32)
    z = z * s4_ref[...] + b4_ref[...]
    z = _silu(z)
    o_ref[...] = z.astype(o_ref.dtype)


def csp_tail(y2d, x2d, p, *, tm=512):
    M, hc = y2d.shape
    c1 = x2d.shape[1]
    c2 = p["c2"]
    tm = min(tm, M)
    Mp = M
    if M % tm:
        Mp = ((M + tm - 1) // tm) * tm
        y2d = jnp.pad(y2d, ((0, Mp - M), (0, 0)))
        x2d = jnp.pad(x2d, ((0, Mp - M), (0, 0)))
    bn_s = p["bn_scale"].astype(jnp.float32)
    bn_b = p["bn_bias"].astype(jnp.float32)
    vec = lambda c: pl.BlockSpec((1, c), lambda i: (0, 0))
    out = pl.pallas_call(
        _csp_tail_kernel,
        out_shape=jax.ShapeDtypeStruct((Mp, c2), jnp.float32),
        grid=(Mp // tm,),
        in_specs=[
            pl.BlockSpec((tm, hc), lambda i: (i, 0)),   # y (from m(cv1(x)))
            pl.BlockSpec((tm, c1), lambda i: (i, 0)),   # x
            pl.BlockSpec((hc, hc), lambda i: (0, 0)),   # cv3 weight
            pl.BlockSpec((c1, hc), lambda i: (0, 0)),   # cv2 weight
            vec(hc), vec(hc),                           # BN(2hc) top half
            vec(hc), vec(hc),                           # BN(2hc) bottom half
            pl.BlockSpec((hc, c2), lambda i: (0, 0)),   # cv4 weight (top rows)
            pl.BlockSpec((hc, c2), lambda i: (0, 0)),   # cv4 weight (bot rows)
            vec(c2), vec(c2),                           # cv4 BN scale/bias
        ],
        out_specs=pl.BlockSpec((tm, c2), lambda i: (i, 0)),
        compiler_params=pltpu.CompilerParams(
            dimension_semantics=("parallel",),
            vmem_limit_bytes=_VMEM_LIMIT),
    )(y2d, x2d, p["cv3_w"], p["cv2_w"],
      bn_s[:hc].reshape(1, -1), bn_b[:hc].reshape(1, -1),
      bn_s[hc:].reshape(1, -1), bn_b[hc:].reshape(1, -1),
      p["cv4_w"][:hc], p["cv4_w"][hc:],
      p["cv4_scale"].reshape(1, -1).astype(jnp.float32),
      p["cv4_bias"].reshape(1, -1).astype(jnp.float32))
    return out[:M] if Mp != M else out


# ----------------------------------------------------------------------------
# BottleneckCSP forward (matches the PyTorch module semantics, BN eval mode).
# ----------------------------------------------------------------------------
def bottleneck_csp_forward(x_nchw, p, *, tm=512):
    n, c1, h, w = x_nchw.shape
    hc, c2 = p["hc"], p["c2"]
    x_nhwc = jnp.transpose(x_nchw, (0, 2, 3, 1))
    x2d = x_nhwc.reshape(n * h * w, c1).astype(jnp.bfloat16)

    # cv1 = Conv(c1, hc, 1): 1x1 conv + BN + SiLU
    y = pointwise_conv_bn_silu(x2d, p["cv1_w"], p["cv1_scale"],
                               p["cv1_bias"], tm=tm)

    # m = n x Bottleneck(hc, hc, e=1.0)
    for blk in p["m"]:
        t = pointwise_conv_bn_silu(y, blk["cv1_w"], blk["cv1_scale"],
                                   blk["cv1_bias"], tm=tm)
        t_pad = jnp.pad(t.reshape(n, h, w, hc),
                        ((0, 0), (1, 1), (1, 1), (0, 0)))  # halo for 3x3
        res = y.reshape(n, h, w, hc) if blk["add"] else None
        y_img = conv3x3_bn_silu(t_pad, blk["cv2_w"].reshape(9, hc, hc),
                                blk["cv2_scale"], blk["cv2_bias"],
                                residual=res)
        y = y_img.reshape(n * h * w, hc)

    # Fused tail: cv3 / cv2 / BN(2hc) / LeakyReLU / cv4(+BN+SiLU)
    out2d = csp_tail(y, x2d, p, tm=tm)
    return jnp.transpose(out2d.reshape(n, h, w, c2), (0, 3, 1, 2))


# ----------------------------------------------------------------------------
# Pure-JAX f32 reference (lax.conv for the 3x3) for correctness checking.
# ----------------------------------------------------------------------------
def ref_forward(x_nchw, p):
    f32 = jnp.float32
    x = jnp.transpose(x_nchw, (0, 2, 3, 1)).astype(f32)
    silu = lambda v: v * jax.nn.sigmoid(v)
    leaky = lambda v: jnp.where(v > 0, v, 0.1 * v)
    pw = lambda inp, wt: jnp.einsum("nhwc,cd->nhwd", inp, wt.astype(f32))
    bn = lambda inp, s, b: inp * s + b

    y = silu(bn(pw(x, p["cv1_w"]), p["cv1_scale"], p["cv1_bias"]))
    for blk in p["m"]:
        t = silu(bn(pw(y, blk["cv1_w"]), blk["cv1_scale"], blk["cv1_bias"]))
        t = jax.lax.conv_general_dilated(
            t, blk["cv2_w"].astype(f32), (1, 1), "SAME",
            dimension_numbers=("NHWC", "HWIO", "NHWC"))
        t = silu(bn(t, blk["cv2_scale"], blk["cv2_bias"]))
        y = y + t if blk["add"] else t
    y1 = pw(y, p["cv3_w"])
    y2 = pw(x, p["cv2_w"])
    cat = leaky(bn(jnp.concatenate([y1, y2], axis=-1),
                   p["bn_scale"], p["bn_bias"]))
    out = silu(bn(pw(cat, p["cv4_w"]), p["cv4_scale"], p["cv4_bias"]))
    return jnp.transpose(out, (0, 3, 1, 2))


# ----------------------------------------------------------------------------
# Deterministic synthetic parameters (shapes match BottleneckCSP.__init__).
# Weights stored in bf16 (MXU operand dtype); folded BN scale/bias in f32.
# ----------------------------------------------------------------------------
def init_params(key, c1, c2, n=1, shortcut=True, e=0.5):
    hc = int(c2 * e)
    keys = iter(jax.random.split(key, 128))

    def w(shape, fan_in):
        v = jax.random.normal(next(keys), shape, jnp.float32) / jnp.sqrt(
            jnp.float32(fan_in))
        return v.astype(jnp.bfloat16)

    def bn_fold(c):  # BatchNorm2d(c) eval mode -> per-channel scale/bias
        gamma = jax.random.uniform(next(keys), (c,), jnp.float32, 0.5, 1.5)
        beta = jax.random.uniform(next(keys), (c,), jnp.float32, -0.1, 0.1)
        mean = jax.random.uniform(next(keys), (c,), jnp.float32, -0.1, 0.1)
        var = jax.random.uniform(next(keys), (c,), jnp.float32, 0.5, 1.5)
        scale = gamma / jnp.sqrt(var + 1e-5)
        return scale, beta - mean * scale

    p = {"hc": hc, "c2": c2}
    p["cv1_w"] = w((c1, hc), c1)
    p["cv1_scale"], p["cv1_bias"] = bn_fold(hc)
    p["cv2_w"] = w((c1, hc), c1)                   # nn.Conv2d(c1, hc, 1)
    p["cv3_w"] = w((hc, hc), hc)                   # nn.Conv2d(hc, hc, 1)
    p["bn_scale"], p["bn_bias"] = bn_fold(2 * hc)  # BatchNorm2d(2*hc)
    p["cv4_w"] = w((2 * hc, c2), 2 * hc)
    p["cv4_scale"], p["cv4_bias"] = bn_fold(c2)
    p["m"] = []
    for _ in range(n):
        b = {}
        b["cv1_w"] = w((hc, hc), hc)               # Bottleneck.cv1 (1x1, e=1)
        b["cv1_scale"], b["cv1_bias"] = bn_fold(hc)
        b["cv2_w"] = w((3, 3, hc, hc), 9 * hc)     # Bottleneck.cv2 (3x3), HWIO
        b["cv2_scale"], b["cv2_bias"] = bn_fold(hc)
        b["add"] = bool(shortcut)                  # c1 == c2 == hc inside m
        p["m"].append(b)
    return p


if __name__ == "__main__":
    key = jax.random.PRNGKey(0)
    k_x, k_p = jax.random.split(key)

    c1, c2, n_blocks = 8, 8, 2
    x = jax.random.normal(k_x, (2, c1, 16, 16), jnp.float32)   # NCHW input
    params = init_params(k_p, c1, c2, n=n_blocks, shortcut=True, e=0.5)

    out = jax.block_until_ready(bottleneck_csp_forward(x, params))
    ref = jax.block_until_ready(ref_forward(x, params))

    assert out.shape == (2, c2, 16, 16), out.shape
    max_err = float(jnp.max(jnp.abs(out - ref)))
    # bf16 MXU operands + bf16 intermediate activations vs f32 reference.
    assert jnp.allclose(out, ref, rtol=5e-2, atol=5e-2), max_err

    print("KERNEL_OK")
</pallas_src>

<mosaic_0001>
module attributes {stable_mosaic.version = 11 : i64} {
  func.func @_pw_kernel(%arg0: i32, %arg1: memref<512x8xbf16, #tpu.memory_space<vmem>>, %arg2: memref<8x4xbf16, #tpu.memory_space<vmem>>, %arg3: memref<1x4xf32, #tpu.memory_space<vmem>>, %arg4: memref<1x4xf32, #tpu.memory_space<vmem>>, %arg5: memref<512x4xbf16, #tpu.memory_space<vmem>>) attributes {dimension_semantics = [#tpu.dimension_semantics<parallel>], iteration_bounds = array<i64: 1>, scalar_prefetch = 0 : i64, scratch_operands = 0 : i64, tpu.core_type = #tpu.core_type<tc>, window_params = [{transform_indices = @transform_0, window_bounds = array<i64: 512, 8>}, {pipeline_mode = #tpu.pipeline_mode<synchronous>, transform_indices = @transform_1, window_bounds = array<i64: 8, 4>}, {pipeline_mode = #tpu.pipeline_mode<synchronous>, transform_indices = @transform_2, window_bounds = array<i64: 1, 4>}, {pipeline_mode = #tpu.pipeline_mode<synchronous>, transform_indices = @transform_3, window_bounds = array<i64: 1, 4>}, {transform_indices = @transform_4, window_bounds = array<i64: 512, 4>}]} {
    %c0 = arith.constant 0 : index
    %c0_0 = arith.constant 0 : index
    %0 = vector.load %arg1[%c0, %c0_0] : memref<512x8xbf16, #tpu.memory_space<vmem>>, vector<512x8xbf16>
    %c0_1 = arith.constant 0 : index
    %c0_2 = arith.constant 0 : index
    %1 = vector.load %arg2[%c0_1, %c0_2] : memref<8x4xbf16, #tpu.memory_space<vmem>>, vector<8x4xbf16>
    %cst = arith.constant dense<0.000000e+00> : vector<512x4xf32>
    %2 = tpu.matmul %0, %1, %cst {dimension_numbers = #tpu.dot_dimension_numbers<[1], [0], [0], [1], [0, 0, 1, 1], [], []>} : vector<512x8xbf16>, vector<8x4xbf16>, vector<512x4xf32> -> vector<512x4xf32>
    %c0_3 = arith.constant 0 : index
    %c0_4 = arith.constant 0 : index
    %3 = vector.load %arg3[%c0_3, %c0_4] : memref<1x4xf32, #tpu.memory_space<vmem>>, vector<1x4xf32>
    %4 = vector.broadcast %3 : vector<1x4xf32> to vector<512x4xf32>
    %5 = arith.mulf %2, %4 : vector<512x4xf32>
    %c0_5 = arith.constant 0 : index
    %c0_6 = arith.constant 0 : index
    %6 = vector.load %arg4[%c0_5, %c0_6] : memref<1x4xf32, #tpu.memory_space<vmem>>, vector<1x4xf32>
    %7 = vector.broadcast %6 : vector<1x4xf32> to vector<512x4xf32>
    %8 = arith.addf %5, %7 : vector<512x4xf32>
    %cst_7 = arith.constant 0.000000e+00 : f32
    %9 = vector.broadcast %cst_7 : f32 to vector<512x4xf32>
    %10 = arith.subf %9, %8 : vector<512x4xf32>
    %11 = math.exp %10 : vector<512x4xf32>
    %cst_8 = arith.constant 1.000000e+00 : f32
    %12 = vector.broadcast %cst_8 : f32 to vector<512x4xf32>
    %13 = arith.addf %12, %11 : vector<512x4xf32>
    %14 = tpu.reciprocal %13 {approx = true} : vector<512x4xf32> -> vector<512x4xf32>
    %15 = arith.mulf %8, %14 : vector<512x4xf32>
    %16 = arith.truncf %15 : vector<512x4xf32> to vector<512x4xbf16>
    %c0_9 = arith.constant 0 : index
    %c0_10 = arith.constant 0 : index
    %17 = vector.load %arg5[%c0_9, %c0_10] : memref<512x4xbf16, #tpu.memory_space<vmem>>, vector<512x4xbf16>
    tpu.vector_store %arg5[%c0_9, %c0_10], %16 {strides = array<i32>} : memref<512x4xbf16, #tpu.memory_space<vmem>>, vector<512x4xbf16>,
    return
  }
  func.func @transform_0(%arg0: i32) -> (i32, i32) {
    %c0_i32 = arith.constant 0 : i32
    %c0_i32_0 = arith.constant 0 : i32
    return %arg0, %c0_i32 : i32, i32
  }
  func.func @transform_1(%arg0: i32) -> (i32, i32) {
    %c0_i32 = arith.constant 0 : i32
    %c0_i32_0 = arith.constant 0 : i32
    %c0_i32_1 = arith.constant 0 : i32
    return %c0_i32, %c0_i32_0 : i32, i32
  }
  func.func @transform_2(%arg0: i32) -> (i32, i32) {
    %c0_i32 = arith.constant 0 : i32
    %c0_i32_0 = arith.constant 0 : i32
    %c0_i32_1 = arith.constant 0 : i32
    return %c0_i32, %c0_i32_0 : i32, i32
  }
  func.func @transform_3(%arg0: i32) -> (i32, i32) {
    %c0_i32 = arith.constant 0 : i32
    %c0_i32_0 = arith.constant 0 : i32
    %c0_i32_1 = arith.constant 0 : i32
    return %c0_i32, %c0_i32_0 : i32, i32
  }
  func.func @transform_4(%arg0: i32) -> (i32, i32) {
    %c0_i32 = arith.constant 0 : i32
    %c0_i32_0 = arith.constant 0 : i32
    return %arg0, %c0_i32 : i32, i32
  }
}

</mosaic_0001>

<llo_original>
// kernel: tpu_custom_call.1
$region0: #{tpu_custom_call.1}
  #allocation0 [shape = 'u32[]', space=smem, size = 0x4, offset = 0x4, fixed_abs, tag = 'smem constant byte address 0x4 - core index']
  #allocation1 [shape = 'u32[144,128]{1,0:T(1,128)}', space=vmem, size = 0x12000, scoped, tag = 'internal scratch']
  %s0 = inlined_call_operand.vmem [shape: bf16[512,8], index: 0, kind: input, shape index: {}]
  %s1 = inlined_call_operand.vmem [shape: bf16[8,4], index: 1, kind: input, shape index: {}]
  %s2 = inlined_call_operand.vmem [shape: f32[1,4], index: 2, kind: input, shape index: {}]
  %s3 = inlined_call_operand.vmem [shape: f32[1,4], index: 3, kind: input, shape index: {}]
  %s4 = inlined_call_operand.vmem [shape: bf16[512,4], index: 4, kind: output, shape index: {}]
  %s5 = sld [smem:[#allocation0]]
  $region26: #{tpu_custom_call.1} parent=0
    _
  %s7 = ssub.s32 1, %s5
  %s8 = scalar_select 0, %s7, %s5
  // Predicated region
  $region2: #{tpu_custom_call.1} parent=0 // pred_check
    _
  $region3: #{tpu_custom_call.1} parent=0 // pred_check_branch
    %10 = sbr.rel (0) target = $region5
  $region4: #{tpu_custom_call.1} parent=0 // pred_region
    _
  $region5: #{tpu_custom_call.1} parent=0 // pred_fallthru
    _
  // Predicated region
  $region6: #{tpu_custom_call.1} parent=0 // pred_check
    _
  $region7: #{tpu_custom_call.1} parent=0 // pred_check_branch
    %12 = sbr.rel (0) target = $region9
  $region8: #{tpu_custom_call.1} parent=0 // pred_region
    _
  $region9: #{tpu_custom_call.1} parent=0 // pred_fallthru
    _
  // Predicated region
  $region10: #{tpu_custom_call.1} parent=0 // pred_check
    _
  $region11: #{tpu_custom_call.1} parent=0 // pred_check_branch
    %14 = sbr.rel (0) target = $region13
  $region12: #{tpu_custom_call.1} parent=0 // pred_region
    _
  $region13: #{tpu_custom_call.1} parent=0 // pred_fallthru
    _
  // Predicated region
  $region14: #{tpu_custom_call.1} parent=0 // pred_check
    _
  $region15: #{tpu_custom_call.1} parent=0 // pred_check_branch
    %16 = sbr.rel (0) target = $region17
  $region16: #{tpu_custom_call.1} parent=0 // pred_region
    _
  $region17: #{tpu_custom_call.1} parent=0 // pred_fallthru
    _
  %v18 = vld [vmem:[%s0] sm:$0xf]
  %v19 = vld [vmem:[%s0 + $0x4] sm:$0xf]
  %v20 = vld [vmem:[%s0 + $0x8] sm:$0xf]
  %v21 = vld [vmem:[%s0 + $0xc] sm:$0xf]
  %v22 = vld [vmem:[%s0 + $0x10] sm:$0xf]
  %v23 = vld [vmem:[%s0 + $0x14] sm:$0xf]
  %v24 = vld [vmem:[%s0 + $0x18] sm:$0xf]
  %v25 = vld [vmem:[%s0 + $0x1c] sm:$0xf]
  %v26 = vld [vmem:[%s0 + $0x20] sm:$0xf]
  %v27 = vld [vmem:[%s0 + $0x24] sm:$0xf]
  %v28 = vld [vmem:[%s0 + $0x28] sm:$0xf]
  %v29 = vld [vmem:[%s0 + $0x2c] sm:$0xf]
  %v30 = vld [vmem:[%s0 + $0x30] sm:$0xf]
  %v31 = vld [vmem:[%s0 + $0x34] sm:$0xf]
  %v32 = vld [vmem:[%s0 + $0x38] sm:$0xf]
  %v33 = vld [vmem:[%s0 + $0x3c] sm:$0xf]
  %v34 = vld [vmem:[%s0 + $0x40] sm:$0xf]
  %v35 = vld [vmem:[%s0 + $0x44] sm:$0xf]
  %v36 = vld [vmem:[%s0 + $0x48] sm:$0xf]
  %v37 = vld [vmem:[%s0 + $0x4c] sm:$0xf]
  %v38 = vld [vmem:[%s0 + $0x50] sm:$0xf]
  %v39 = vld [vmem:[%s0 + $0x54] sm:$0xf]
  %v40 = vld [vmem:[%s0 + $0x58] sm:$0xf]
  %v41 = vld [vmem:[%s0 + $0x5c] sm:$0xf]
  %v42 = vld [vmem:[%s0 + $0x60] sm:$0xf]
  %v43 = vld [vmem:[%s0 + $0x64] sm:$0xf]
  %v44 = vld [vmem:[%s0 + $0x68] sm:$0xf]
  %v45 = vld [vmem:[%s0 + $0x6c] sm:$0xf]
  %v46 = vld [vmem:[%s0 + $0x70] sm:$0xf]
  %v47 = vld [vmem:[%s0 + $0x74] sm:$0xf]
  %v48 = vld [vmem:[%s0 + $0x78] sm:$0xf]
  %v49 = vld [vmem:[%s0 + $0x7c] sm:$0xf]
  %v50 = vld [vmem:[%s0 + $0x80] sm:$0xf]
  %v51 = vld [vmem:[%s0 + $0x84] sm:$0xf]
  %v52 = vld [vmem:[%s0 + $0x88] sm:$0xf]
  %v53 = vld [vmem:[%s0 + $0x8c] sm:$0xf]
  %v54 = vld [vmem:[%s0 + $0x90] sm:$0xf]
  %v55 = vld [vmem:[%s0 + $0x94] sm:$0xf]
  %v56 = vld [vmem:[%s0 + $0x98] sm:$0xf]
  %v57 = vld [vmem:[%s0 + $0x9c] sm:$0xf]
  %v58 = vld [vmem:[%s0 + $0xa0] sm:$0xf]
  %v59 = vld [vmem:[%s0 + $0xa4] sm:$0xf]
  %v60 = vld [vmem:[%s0 + $0xa8] sm:$0xf]
  %v61 = vld [vmem:[%s0 + $0xac] sm:$0xf]
  %v62 = vld [vmem:[%s0 + $0xb0] sm:$0xf]
  %v63 = vld [vmem:[%s0 + $0xb4] sm:$0xf]
  %v64 = vld [vmem:[%s0 + $0xb8] sm:$0xf]
  %v65 = vld [vmem:[%s0 + $0xbc] sm:$0xf]
  %v66 = vld [vmem:[%s0 + $0xc0] sm:$0xf]
  %v67 = vld [vmem:[%s0 + $0xc4] sm:$0xf]
  %v68 = vld [vmem:[%s0 + $0xc8] sm:$0xf]
  %v69 = vld [vmem:[%s0 + $0xcc] sm:$0xf]
  %v70 = vld [vmem:[%s0 + $0xd0] sm:$0xf]
  %v71 = vld [vmem:[%s0 + $0xd4] sm:$0xf]
  %v72 = vld [vmem:[%s0 + $0xd8] sm:$0xf]
  %v73 = vld [vmem:[%s0 + $0xdc] sm:$0xf]
  %v74 = vld [vmem:[%s0 + $0xe0] sm:$0xf]
  %v75 = vld [vmem:[%s0 + $0xe4] sm:$0xf]
  %v76 = vld [vmem:[%s0 + $0xe8] sm:$0xf]
  %v77 = vld [vmem:[%s0 + $0xec] sm:$0xf]
  %v78 = vld [vmem:[%s0 + $0xf0] sm:$0xf]
  %v79 = vld [vmem:[%s0 + $0xf4] sm:$0xf]
  %v80 = vld [vmem:[%s0 + $0xf8] sm:$0xf]
  %v81 = vld [vmem:[%s0 + $0xfc] sm:$0xf]
  %v82 = vld [vmem:[%s1] sm:$0xf]
  %v147 = vunpack.c.l.b16 %v18
  %v148 = vunpack.c.l.b16 %v19
  %v149 = vunpack.c.l.b16 %v20
  %v150 = vunpack.c.l.b16 %v21
  %v151 = vunpack.c.l.b16 %v22
  %v152 = vunpack.c.l.b16 %v23
  %v153 = vunpack.c.l.b16 %v24
  %v154 = vunpack.c.l.b16 %v25
  %v155 = vunpack.c.l.b16 %v26
  %v156 = vunpack.c.l.b16 %v27
  %v157 = vunpack.c.l.b16 %v28
  %v158 = vunpack.c.l.b16 %v29
  %v159 = vunpack.c.l.b16 %v30
  %v160 = vunpack.c.l.b16 %v31
  %v161 = vunpack.c.l.b16 %v32
  %v162 = vunpack.c.l.b16 %v33
  %v163 = vunpack.c.l.b16 %v34
  %v164 = vunpack.c.l.b16 %v35
  %v165 = vunpack.c.l.b16 %v36
  %v166 = vunpack.c.l.b16 %v37
  %v167 = vunpack.c.l.b16 %v38
  %v168 = vunpack.c.l.b16 %v39
  %v169 = vunpack.c.l.b16 %v40
  %v170 = vunpack.c.l.b16 %v41
  %v171 = vunpack.c.l.b16 %v42
  %v172 = vunpack.c.l.b16 %v43
  %v173 = vunpack.c.l.b16 %v44
  %v174 = vunpack.c.l.b16 %v45
  %v175 = vunpack.c.l.b16 %v46
  %v176 = vunpack.c.l.b16 %v47
  %v177 = vunpack.c.l.b16 %v48
  %v178 = vunpack.c.l.b16 %v49
  %v179 = vunpack.c.l.b16 %v50
  %v180 = vunpack.c.l.b16 %v51
  %v181 = vunpack.c.l.b16 %v52
  %v182 = vunpack.c.l.b16 %v53
  %v183 = vunpack.c.l.b16 %v54
  %v184 = vunpack.c.l.b16 %v55
  %v185 = vunpack.c.l.b16 %v56
  %v186 = vunpack.c.l.b16 %v57
  %v187 = vunpack.c.l.b16 %v58
  %v188 = vunpack.c.l.b16 %v59
  %v189 = vunpack.c.l.b16 %v60
  %v190 = vunpack.c.l.b16 %v61
  %v191 = vunpack.c.l.b16 %v62
  %v192 = vunpack.c.l.b16 %v63
  %v193 = vunpack.c.l.b16 %v64
  %v194 = vunpack.c.l.b16 %v65
  %v195 = vunpack.c.l.b16 %v66
  %v196 = vunpack.c.l.b16 %v67
  %v197 = vunpack.c.l.b16 %v68
  %v198 = vunpack.c.l.b16 %v69
  %v199 = vunpack.c.l.b16 %v70
  %v200 = vunpack.c.l.b16 %v71
  %v201 = vunpack.c.l.b16 %v72
  %v202 = vunpack.c.l.b16 %v73
  %v203 = vunpack.c.l.b16 %v74
  %v204 = vunpack.c.l.b16 %v75
  %v205 = vunpack.c.l.b16 %v76
  %v206 = vunpack.c.l.b16 %v77
  %v207 = vunpack.c.l.b16 %v78
  %v208 = vunpack.c.l.b16 %v79
  %v209 = vunpack.c.l.b16 %v80
  %v210 = vunpack.c.l.b16 %v81
  %v211 = vpack.c.b16 %v148, %v147
  %v212 = vpack.c.b16 %v150, %v149
  %v213 = vpack.c.b16 %v152, %v151
  %v214 = vpack.c.b16 %v154, %v153
  %v215 = vpack.c.b16 %v156, %v155
  %v216 = vpack.c.b16 %v158, %v157
  %v217 = vpack.c.b16 %v160, %v159
  %v218 = vpack.c.b16 %v162, %v161
  %v219 = vpack.c.b16 %v164, %v163
  %v220 = vpack.c.b16 %v166, %v165
  %v221 = vpack.c.b16 %v168, %v167
  %v222 = vpack.c.b16 %v170, %v169
  %v223 = vpack.c.b16 %v172, %v171
  %v224 = vpack.c.b16 %v174, %v173
  %v225 = vpack.c.b16 %v176, %v175
  %v226 = vpack.c.b16 %v178, %v177
  %v227 = vpack.c.b16 %v180, %v179
  %v228 = vpack.c.b16 %v182, %v181
  %v229 = vpack.c.b16 %v184, %v183
  %v230 = vpack.c.b16 %v186, %v185
  %v231 = vpack.c.b16 %v188, %v187
  %v232 = vpack.c.b16 %v190, %v189
  %v233 = vpack.c.b16 %v192, %v191
  %v234 = vpack.c.b16 %v194, %v193
  %v235 = vpack.c.b16 %v196, %v195
  %v236 = vpack.c.b16 %v198, %v197
  %v237 = vpack.c.b16 %v200, %v199
  %v238 = vpack.c.b16 %v202, %v201
  %v239 = vpack.c.b16 %v204, %v203
  %v240 = vpack.c.b16 %v206, %v205
  %v241 = vpack.c.b16 %v208, %v207
  %v242 = vpack.c.b16 %v210, %v209
  %vm243 = vcmask 64512
  %v245 = vsel %vm243, %v211, 0
  %v248 = vsel %vm243, %v212, 0
  %v251 = vsel %vm243, %v213, 0
  %v254 = vsel %vm243, %v214, 0
  %v257 = vsel %vm243, %v215, 0
  %v260 = vsel %vm243, %v216, 0
  %v263 = vsel %vm243, %v217, 0
  %v266 = vsel %vm243, %v218, 0
  %v269 = vsel %vm243, %v219, 0
  %v272 = vsel %vm243, %v220, 0
  %v275 = vsel %vm243, %v221, 0
  %v278 = vsel %vm243, %v222, 0
  %v281 = vsel %vm243, %v223, 0
  %v284 = vsel %vm243, %v224, 0
  %v287 = vsel %vm243, %v225, 0
  %v290 = vsel %vm243, %v226, 0
  %v293 = vsel %vm243, %v227, 0
  %v296 = vsel %vm243, %v228, 0
  %v299 = vsel %vm243, %v229, 0
  %v302 = vsel %vm243, %v230, 0
  %v305 = vsel %vm243, %v231, 0
  %v308 = vsel %vm243, %v232, 0
  %v311 = vsel %vm243, %v233, 0
  %v314 = vsel %vm243, %v234, 0
  %v317 = vsel %vm243, %v235, 0
  %v320 = vsel %vm243, %v236, 0
  %v323 = vsel %vm243, %v237, 0
  %v326 = vsel %vm243, %v238, 0
  %v329 = vsel %vm243, %v239, 0
  %v332 = vsel %vm243, %v240, 0
  %v335 = vsel %vm243, %v241, 0
  %v338 = vsel %vm243, %v242, 0
  %vm340 = vcmask 1043456
  %v342 = vsel %vm340, %v82, 0
  %344 = vmatprep.subr.bf16.mxu0 0
  %345 = vmatpush1.bf16.msra.mxu0 0
  %346 = vmatprep.subr.bf16.mxu0 0
  %347 = vmatpush1.bf16.msra.mxu0 0
  %348 = vmatprep.subr.bf16.mxu0 0
  %349 = vmatpush1.bf16.msra.mxu0 0
  %350 = vmatprep.subr.bf16.mxu0 0
  %351 = vmatpush1.bf16.msra.mxu0 0
  %352 = vmatprep.subr.bf16.mxu0 0
  %353 = vmatpush1.bf16.msra.mxu0 0
  %354 = vmatprep.subr.bf16.mxu0 0
  %355 = vmatpush1.bf16.msra.mxu0 0
  %356 = vmatprep.subr.bf16.mxu0 0
  %357 = vmatpush1.bf16.msra.mxu0 0
  %358 = vmatprep.subr.bf16.mxu0 0
  %359 = vmatpush1.bf16.msra.mxu0 %v342
  %360 = vmatprep.subr.bf16.mxu0 0
  %361 = vmatpush2.bf16.msra.mxu0 0
  %362 = vmatprep.subr.bf16.mxu0 0
  %363 = vmatpush2.bf16.msra.mxu0 0
  %364 = vmatprep.subr.bf16.mxu0 0
  %365 = vmatpush2.bf16.msra.mxu0 0
  %366 = vmatprep.subr.bf16.mxu0 0
  %367 = vmatpush2.bf16.msra.mxu0 0
  %368 = vmatprep.subr.bf16.mxu0 0
  %369 = vmatpush2.bf16.msra.mxu0 0
  %370 = vmatprep.subr.bf16.mxu0 0
  %371 = vmatpush2.bf16.msra.mxu0 0
  %372 = vmatprep.subr.bf16.mxu0 0
  %373 = vmatpush2.bf16.msra.mxu0 0
  %374 = vmatprep.subr.bf16.mxu0 0
  %375 = vmatpush2.bf16.msra.mxu0 0
  %376 = vmatprep.mubr.bf16.mxu0 0
  %377 = vmatmul.mubr.bf16.gmra.mxu0 %v245
  %v378 = vpop.f32.mrf.mxu0
  %v379 = vadd.f32 0.0, %v378
  %v380 = vpop.f32.mrf.mxu0
  %v381 = vpop.f32.mrf.mxu0
  %v382 = vadd.f32 0.0, %v381
  %v383 = vpop.f32.mrf.mxu0
  %384 = vmatprep.mubr.bf16.mxu0 0
  %385 = vmatmul.mubr.bf16.gmra.mxu0 %v248
  %v386 = vpop.f32.mrf.mxu0
  %v387 = vadd.f32 0.0, %v386
  %v388 = vpop.f32.mrf.mxu0
  %v389 = vpop.f32.mrf.mxu0
  %v390 = vadd.f32 0.0, %v389
  %v391 = vpop.f32.mrf.mxu0
  %392 = vmatprep.mubr.bf16.mxu0 0
  %393 = vmatmul.mubr.bf16.gmra.mxu0 %v251
  %v394 = vpop.f32.mrf.mxu0
  %v395 = vadd.f32 0.0, %v394
  %v396 = vpop.f32.mrf.mxu0
  %v397 = vpop.f32.mrf.mxu0
  %v398 = vadd.f32 0.0, %v397
  %v399 = vpop.f32.mrf.mxu0
  %400 = vmatprep.mubr.bf16.mxu0 0
  %401 = vmatmul.mubr.bf16.gmra.mxu0 %v254
  %v402 = vpop.f32.mrf.mxu0
  %v403 = vadd.f32 0.0, %v402
  %v404 = vpop.f32.mrf.mxu0
  %v405 = vpop.f32.mrf.mxu0
  %v406 = vadd.f32 0.0, %v405
  %v407 = vpop.f32.mrf.mxu0
  %408 = vmatprep.mubr.bf16.mxu0 0
  %409 = vmatmul.mubr.bf16.gmra.mxu0 %v257
  %v410 = vpop.f32.mrf.mxu0
  %v411 = vadd.f32 0.0, %v410
  %v412 = vpop.f32.mrf.mxu0
  %v413 = vpop.f32.mrf.mxu0
  %v414 = vadd.f32 0.0, %v413
  %v415 = vpop.f32.mrf.mxu0
  %416 = vmatprep.mubr.bf16.mxu0 0
  %417 = vmatmul.mubr.bf16.gmra.mxu0 %v260
  %v418 = vpop.f32.mrf.mxu0
  %v419 = vadd.f32 0.0, %v418
  %v420 = vpop.f32.mrf.mxu0
  %v421 = vpop.f32.mrf.mxu0
  %v422 = vadd.f32 0.0, %v421
  %v423 = vpop.f32.mrf.mxu0
  %424 = vmatprep.mubr.bf16.mxu0 0
  %425 = vmatmul.mubr.bf16.gmra.mxu0 %v263
  %v426 = vpop.f32.mrf.mxu0
  %v427 = vadd.f32 0.0, %v426
  %v428 = vpop.f32.mrf.mxu0
  %v429 = vpop.f32.mrf.mxu0
  %v430 = vadd.f32 0.0, %v429
  %v431 = vpop.f32.mrf.mxu0
  %432 = vmatprep.mubr.bf16.mxu0 0
  %433 = vmatmul.mubr.bf16.gmra.mxu0 %v266
  %v434 = vpop.f32.mrf.mxu0
  %v435 = vadd.f32 0.0, %v434
  %v436 = vpop.f32.mrf.mxu0
  %v437 = vpop.f32.mrf.mxu0
  %v438 = vadd.f32 0.0, %v437
  %v439 = vpop.f32.mrf.mxu0
  %440 = vmatprep.mubr.bf16.mxu0 0
  %441 = vmatmul.mubr.bf16.gmra.mxu0 %v269
  %v442 = vpop.f32.mrf.mxu0
  %v443 = vadd.f32 0.0, %v442
  %v444 = vpop.f32.mrf.mxu0
  %v445 = vpop.f32.mrf.mxu0
  %v446 = vadd.f32 0.0, %v445
  %v447 = vpop.f32.mrf.mxu0
  %448 = vmatprep.mubr.bf16.mxu0 0
  %449 = vmatmul.mubr.bf16.gmra.mxu0 %v272
  %v450 = vpop.f32.mrf.mxu0
  %v451 = vadd.f32 0.0, %v450
  %v452 = vpop.f32.mrf.mxu0
  %v453 = vpop.f32.mrf.mxu0
  %v454 = vadd.f32 0.0, %v453
  %v455 = vpop.f32.mrf.mxu0
  %456 = vmatprep.mubr.bf16.mxu0 0
  %457 = vmatmul.mubr.bf16.gmra.mxu0 %v275
  %v458 = vpop.f32.mrf.mxu0
  %v459 = vadd.f32 0.0, %v458
  %v460 = vpop.f32.mrf.mxu0
  %v461 = vpop.f32.mrf.mxu0
  %v462 = vadd.f32 0.0, %v461
  %v463 = vpop.f32.mrf.mxu0
  %464 = vmatprep.mubr.bf16.mxu0 0
  %465 = vmatmul.mubr.bf16.gmra.mxu0 %v278
  %v466 = vpop.f32.mrf.mxu0
  %v467 = vadd.f32 0.0, %v466
  %v468 = vpop.f32.mrf.mxu0
  %v469 = vpop.f32.mrf.mxu0
  %v470 = vadd.f32 0.0, %v469
  %v471 = vpop.f32.mrf.mxu0
  %472 = vmatprep.mubr.bf16.mxu0 0
  %473 = vmatmul.mubr.bf16.gmra.mxu0 %v281
  %v474 = vpop.f32.mrf.mxu0
  %v475 = vadd.f32 0.0, %v474
  %v476 = vpop.f32.mrf.mxu0
  %v477 = vpop.f32.mrf.mxu0
  %v478 = vadd.f32 0.0, %v477
  %v479 = vpop.f32.mrf.mxu0
  %480 = vmatprep.mubr.bf16.mxu0 0
  %481 = vmatmul.mubr.bf16.gmra.mxu0 %v284
  %v482 = vpop.f32.mrf.mxu0
  %v483 = vadd.f32 0.0, %v482
  %v484 = vpop.f32.mrf.mxu0
  %v485 = vpop.f32.mrf.mxu0
  %v486 = vadd.f32 0.0, %v485
  %v487 = vpop.f32.mrf.mxu0
  %488 = vmatprep.mubr.bf16.mxu0 0
  %489 = vmatmul.mubr.bf16.gmra.mxu0 %v287
  %v490 = vpop.f32.mrf.mxu0
  %v491 = vadd.f32 0.0, %v490
  %v492 = vpop.f32.mrf.mxu0
  %v493 = vpop.f32.mrf.mxu0
  %v494 = vadd.f32 0.0, %v493
  %v495 = vpop.f32.mrf.mxu0
  %496 = vmatprep.mubr.bf16.mxu0 0
  %497 = vmatmul.mubr.bf16.gmra.mxu0 %v290
  %v498 = vpop.f32.mrf.mxu0
  %v499 = vadd.f32 0.0, %v498
  %v500 = vpop.f32.mrf.mxu0
  %v501 = vpop.f32.mrf.mxu0
  %v502 = vadd.f32 0.0, %v501
  %v503 = vpop.f32.mrf.mxu0
  %504 = vmatprep.mubr.bf16.mxu0 0
  %505 = vmatmul.mubr.bf16.gmra.mxu0 %v293
  %v506 = vpop.f32.mrf.mxu0
  %v507 = vadd.f32 0.0, %v506
  %v508 = vpop.f32.mrf.mxu0
  %v509 = vpop.f32.mrf.mxu0
  %v510 = vadd.f32 0.0, %v509
  %v511 = vpop.f32.mrf.mxu0
  %512 = vmatprep.mubr.bf16.mxu0 0
  %513 = vmatmul.mubr.bf16.gmra.mxu0 %v296
  %v514 = vpop.f32.mrf.mxu0
  %v515 = vadd.f32 0.0, %v514
  %v516 = vpop.f32.mrf.mxu0
  %v517 = vpop.f32.mrf.mxu0
  %v518 = vadd.f32 0.0, %v517
  %v519 = vpop.f32.mrf.mxu0
  %520 = vmatprep.mubr.bf16.mxu0 0
  %521 = vmatmul.mubr.bf16.gmra.mxu0 %v299
  %v522 = vpop.f32.mrf.mxu0
  %v523 = vadd.f32 0.0, %v522
  %v524 = vpop.f32.mrf.mxu0
  %v525 = vpop.f32.mrf.mxu0
  %v526 = vadd.f32 0.0, %v525
  %v527 = vpop.f32.mrf.mxu0
  %528 = vmatprep.mubr.bf16.mxu0 0
  %529 = vmatmul.mubr.bf16.gmra.mxu0 %v302
  %v530 = vpop.f32.mrf.mxu0
  %v531 = vadd.f32 0.0, %v530
  %v532 = vpop.f32.mrf.mxu0
  %v533 = vpop.f32.mrf.mxu0
  %v534 = vadd.f32 0.0, %v533
  %v535 = vpop.f32.mrf.mxu0
  %536 = vmatprep.mubr.bf16.mxu0 0
  %537 = vmatmul.mubr.bf16.gmra.mxu0 %v305
  %v538 = vpop.f32.mrf.mxu0
  %v539 = vadd.f32 0.0, %v538
  %v540 = vpop.f32.mrf.mxu0
  %v541 = vpop.f32.mrf.mxu0
  %v542 = vadd.f32 0.0, %v541
  %v543 = vpop.f32.mrf.mxu0
  %544 = vmatprep.mubr.bf16.mxu0 0
  %545 = vmatmul.mubr.bf16.gmra.mxu0 %v308
  %v546 = vpop.f32.mrf.mxu0
  %v547 = vadd.f32 0.0, %v546
  %v548 = vpop.f32.mrf.mxu0
  %v549 = vpop.f32.mrf.mxu0
  %v550 = vadd.f32 0.0, %v549
  %v551 = vpop.f32.mrf.mxu0
  %552 = vmatprep.mubr.bf16.mxu0 0
  %553 = vmatmul.mubr.bf16.gmra.mxu0 %v311
  %v554 = vpop.f32.mrf.mxu0
  %v555 = vadd.f32 0.0, %v554
  %v556 = vpop.f32.mrf.mxu0
  %v557 = vpop.f32.mrf.mxu0
  %v558 = vadd.f32 0.0, %v557
  %v559 = vpop.f32.mrf.mxu0
  %560 = vmatprep.mubr.bf16.mxu0 0
  %561 = vmatmul.mubr.bf16.gmra.mxu0 %v314
  %v562 = vpop.f32.mrf.mxu0
  %v563 = vadd.f32 0.0, %v562
  %v564 = vpop.f32.mrf.mxu0
  %v565 = vpop.f32.mrf.mxu0
  %v566 = vadd.f32 0.0, %v565
  %v567 = vpop.f32.mrf.mxu0
  %568 = vmatprep.mubr.bf16.mxu0 0
  %569 = vmatmul.mubr.bf16.gmra.mxu0 %v317
  %v570 = vpop.f32.mrf.mxu0
  %v571 = vadd.f32 0.0, %v570
  %v572 = vpop.f32.mrf.mxu0
  %v573 = vpop.f32.mrf.mxu0
  %v574 = vadd.f32 0.0, %v573
  %v575 = vpop.f32.mrf.mxu0
  %576 = vmatprep.mubr.bf16.mxu0 0
  %577 = vmatmul.mubr.bf16.gmra.mxu0 %v320
  %v578 = vpop.f32.mrf.mxu0
  %v579 = vadd.f32 0.0, %v578
  %v580 = vpop.f32.mrf.mxu0
  %v581 = vpop.f32.mrf.mxu0
  %v582 = vadd.f32 0.0, %v581
  %v583 = vpop.f32.mrf.mxu0
  %584 = vmatprep.mubr.bf16.mxu0 0
  %585 = vmatmul.mubr.bf16.gmra.mxu0 %v323
  %v586 = vpop.f32.mrf.mxu0
  %v587 = vadd.f32 0.0, %v586
  %v588 = vpop.f32.mrf.mxu0
  %v589 = vpop.f32.mrf.mxu0
  %v590 = vadd.f32 0.0, %v589
  %v591 = vpop.f32.mrf.mxu0
  %592 = vmatprep.mubr.bf16.mxu0 0
  %593 = vmatmul.mubr.bf16.gmra.mxu0 %v326
  %v594 = vpop.f32.mrf.mxu0
  %v595 = vadd.f32 0.0, %v594
  %v596 = vpop.f32.mrf.mxu0
  %v597 = vpop.f32.mrf.mxu0
  %v598 = vadd.f32 0.0, %v597
  %v599 = vpop.f32.mrf.mxu0
  %600 = vmatprep.mubr.bf16.mxu0 0
  %601 = vmatmul.mubr.bf16.gmra.mxu0 %v329
  %v602 = vpop.f32.mrf.mxu0
  %v603 = vadd.f32 0.0, %v602
  %v604 = vpop.f32.mrf.mxu0
  %v605 = vpop.f32.mrf.mxu0
  %v606 = vadd.f32 0.0, %v605
  %v607 = vpop.f32.mrf.mxu0
  %608 = vmatprep.mubr.bf16.mxu0 0
  %609 = vmatmul.mubr.bf16.gmra.mxu0 %v332
  %v610 = vpop.f32.mrf.mxu0
  %v611 = vadd.f32 0.0, %v610
  %v612 = vpop.f32.mrf.mxu0
  %v613 = vpop.f32.mrf.mxu0
  %v614 = vadd.f32 0.0, %v613
  %v615 = vpop.f32.mrf.mxu0
  %616 = vmatprep.mubr.bf16.mxu0 0
  %617 = vmatmul.mubr.bf16.gmra.mxu0 %v335
  %v618 = vpop.f32.mrf.mxu0
  %v619 = vadd.f32 0.0, %v618
  %v620 = vpop.f32.mrf.mxu0
  %v621 = vpop.f32.mrf.mxu0
  %v622 = vadd.f32 0.0, %v621
  %v623 = vpop.f32.mrf.mxu0
  %624 = vmatprep.mubr.bf16.mxu0 0
  %625 = vmatmul.mubr.bf16.gmra.mxu0 %v338
  %v626 = vpop.f32.mrf.mxu0
  %v627 = vadd.f32 0.0, %v626
  %v628 = vpop.f32.mrf.mxu0
  %v629 = vpop.f32.mrf.mxu0
  %v630 = vadd.f32 0.0, %v629
  %v631 = vpop.f32.mrf.mxu0
  %632 = vdwg.mxu0
  %v633 = vld [vmem:[%s2] sm:$0x1]
  %v635 = vlaneseq
  %v636 = vshrl.u32 %v635, 7
  %v637 = vsub.s32 0, %v636
  %v638 = vrot.slane %v633, %v637
  %v640 = vmul.f32 %v379, %v638
  %v641 = vmul.f32 %v382, %v638
  %v642 = vmul.f32 %v387, %v638
  %v643 = vmul.f32 %v390, %v638
  %v644 = vmul.f32 %v395, %v638
  %v645 = vmul.f32 %v398, %v638
  %v646 = vmul.f32 %v403, %v638
  %v647 = vmul.f32 %v406, %v638
  %v648 = vmul.f32 %v411, %v638
  %v649 = vmul.f32 %v414, %v638
  %v650 = vmul.f32 %v419, %v638
  %v651 = vmul.f32 %v422, %v638
  %v652 = vmul.f32 %v427, %v638
  %v653 = vmul.f32 %v430, %v638
  %v654 = vmul.f32 %v435, %v638
  %v655 = vmul.f32 %v438, %v638
  %v656 = vmul.f32 %v443, %v638
  %v657 = vmul.f32 %v446, %v638
  %v658 = vmul.f32 %v451, %v638
  %v659 = vmul.f32 %v454, %v638
  %v660 = vmul.f32 %v459, %v638
  %v661 = vmul.f32 %v462, %v638
  %v662 = vmul.f32 %v467, %v638
  %v663 = vmul.f32 %v470, %v638
  %v664 = vmul.f32 %v475, %v638
  %v665 = vmul.f32 %v478, %v638
  %v666 = vmul.f32 %v483, %v638
  %v667 = vmul.f32 %v486, %v638
  %v668 = vmul.f32 %v491, %v638
  %v669 = vmul.f32 %v494, %v638
  %v670 = vmul.f32 %v499, %v638
  %v671 = vmul.f32 %v502, %v638
  %v672 = vmul.f32 %v507, %v638
  %v673 = vmul.f32 %v510, %v638
  %v674 = vmul.f32 %v515, %v638
  %v675 = vmul.f32 %v518, %v638
  %v676 = vmul.f32 %v523, %v638
  %v677 = vmul.f32 %v526, %v638
  %v678 = vmul.f32 %v531, %v638
  %v679 = vmul.f32 %v534, %v638
  %v680 = vmul.f32 %v539, %v638
  %v681 = vmul.f32 %v542, %v638
  %v682 = vmul.f32 %v547, %v638
  %v683 = vmul.f32 %v550, %v638
  %v684 = vmul.f32 %v555, %v638
  %v685 = vmul.f32 %v558, %v638
  %v686 = vmul.f32 %v563, %v638
  %v687 = vmul.f32 %v566, %v638
  %v688 = vmul.f32 %v571, %v638
  %v689 = vmul.f32 %v574, %v638
  %v690 = vmul.f32 %v579, %v638
  %v691 = vmul.f32 %v582, %v638
  %v692 = vmul.f32 %v587, %v638
  %v693 = vmul.f32 %v590, %v638
  %v694 = vmul.f32 %v595, %v638
  %v695 = vmul.f32 %v598, %v638
  %v696 = vmul.f32 %v603, %v638
  %v697 = vmul.f32 %v606, %v638
  %v698 = vmul.f32 %v611, %v638
  %v699 = vmul.f32 %v614, %v638
  %v700 = vmul.f32 %v619, %v638
  %v701 = vmul.f32 %v622, %v638
  %v702 = vmul.f32 %v627, %v638
  %v703 = vmul.f32 %v630, %v638
  %v704 = vld [vmem:[%s3] sm:$0x1]
  %v706 = vlaneseq
  %v707 = vshrl.u32 %v706, 7
  %v708 = vsub.s32 0, %v707
  %v709 = vrot.slane %v704, %v708
  %v711 = vadd.f32 %v640, %v709
  %v712 = vadd.f32 %v641, %v709
  %v713 = vadd.f32 %v642, %v709
  %v714 = vadd.f32 %v643, %v709
  %v715 = vadd.f32 %v644, %v709
  %v716 = vadd.f32 %v645, %v709
  %v717 = vadd.f32 %v646, %v709
  %v718 = vadd.f32 %v647, %v709
  %v719 = vadd.f32 %v648, %v709
  %v720 = vadd.f32 %v649, %v709
  %v721 = vadd.f32 %v650, %v709
  %v722 = vadd.f32 %v651, %v709
  %v723 = vadd.f32 %v652, %v709
  %v724 = vadd.f32 %v653, %v709
  %v725 = vadd.f32 %v654, %v709
  %v726 = vadd.f32 %v655, %v709
  %v727 = vadd.f32 %v656, %v709
  %v728 = vadd.f32 %v657, %v709
  %v729 = vadd.f32 %v658, %v709
  %v730 = vadd.f32 %v659, %v709
  %v731 = vadd.f32 %v660, %v709
  %v732 = vadd.f32 %v661, %v709
  %v733 = vadd.f32 %v662, %v709
  %v734 = vadd.f32 %v663, %v709
  %v735 = vadd.f32 %v664, %v709
  %v736 = vadd.f32 %v665, %v709
  %v737 = vadd.f32 %v666, %v709
  %v738 = vadd.f32 %v667, %v709
  %v739 = vadd.f32 %v668, %v709
  %v740 = vadd.f32 %v669, %v709
  %v741 = vadd.f32 %v670, %v709
  %v742 = vadd.f32 %v671, %v709
  %v743 = vadd.f32 %v672, %v709
  %v744 = vadd.f32 %v673, %v709
  %v745 = vadd.f32 %v674, %v709
  %v746 = vadd.f32 %v675, %v709
  %v747 = vadd.f32 %v676, %v709
  %v748 = vadd.f32 %v677, %v709
  %v749 = vadd.f32 %v678, %v709
  %v750 = vadd.f32 %v679, %v709
  %v751 = vadd.f32 %v680, %v709
  %v752 = vadd.f32 %v681, %v709
  %v753 = vadd.f32 %v682, %v709
  %v754 = vadd.f32 %v683, %v709
  %v755 = vadd.f32 %v684, %v709
  %v756 = vadd.f32 %v685, %v709
  %v757 = vadd.f32 %v686, %v709
  %v758 = vadd.f32 %v687, %v709
  %v759 = vadd.f32 %v688, %v709
  %v760 = vadd.f32 %v689, %v709
  %v761 = vadd.f32 %v690, %v709
  %v762 = vadd.f32 %v691, %v709
  %v763 = vadd.f32 %v692, %v709
  %v764 = vadd.f32 %v693, %v709
  %v765 = vadd.f32 %v694, %v709
  %v766 = vadd.f32 %v695, %v709
  %v767 = vadd.f32 %v696, %v709
  %v768 = vadd.f32 %v697, %v709
  %v769 = vadd.f32 %v698, %v709
  %v770 = vadd.f32 %v699, %v709
  %v771 = vadd.f32 %v700, %v709
  %v772 = vadd.f32 %v701, %v709
  %v773 = vadd.f32 %v702, %v709
  %v774 = vadd.f32 %v703, %v709
  %v775 = vsub.f32 0.0, %v711
  %v776 = vsub.f32 0.0, %v712
  %v777 = vsub.f32 0.0, %v713
  %v778 = vsub.f32 0.0, %v714
  %v779 = vsub.f32 0.0, %v715
  %v780 = vsub.f32 0.0, %v716
  %v781 = vsub.f32 0.0, %v717
  %v782 = vsub.f32 0.0, %v718
  %v783 = vsub.f32 0.0, %v719
  %v784 = vsub.f32 0.0, %v720
  %v785 = vsub.f32 0.0, %v721
  %v786 = vsub.f32 0.0, %v722
  %v787 = vsub.f32 0.0, %v723
  %v788 = vsub.f32 0.0, %v724
  %v789 = vsub.f32 0.0, %v725
  %v790 = vsub.f32 0.0, %v726
  %v791 = vsub.f32 0.0, %v727
  %v792 = vsub.f32 0.0, %v728
  %v793 = vsub.f32 0.0, %v729
  %v794 = vsub.f32 0.0, %v730
  %v795 = vsub.f32 0.0, %v731
  %v796 = vsub.f32 0.0, %v732
  %v797 = vsub.f32 0.0, %v733
  %v798 = vsub.f32 0.0, %v734
  %v799 = vsub.f32 0.0, %v735
  %v800 = vsub.f32 0.0, %v736
  %v801 = vsub.f32 0.0, %v737
  %v802 = vsub.f32 0.0, %v738
  %v803 = vsub.f32 0.0, %v739
  %v804 = vsub.f32 0.0, %v740
  %v805 = vsub.f32 0.0, %v741
  %v806 = vsub.f32 0.0, %v742
  %v807 = vsub.f32 0.0, %v743
  %v808 = vsub.f32 0.0, %v744
  %v809 = vsub.f32 0.0, %v745
  %v810 = vsub.f32 0.0, %v746
  %v811 = vsub.f32 0.0, %v747
  %v812 = vsub.f32 0.0, %v748
  %v813 = vsub.f32 0.0, %v749
  %v814 = vsub.f32 0.0, %v750
  %v815 = vsub.f32 0.0, %v751
  %v816 = vsub.f32 0.0, %v752
  %v817 = vsub.f32 0.0, %v753
  %v818 = vsub.f32 0.0, %v754
  %v819 = vsub.f32 0.0, %v755
  %v820 = vsub.f32 0.0, %v756
  %v821 = vsub.f32 0.0, %v757
  %v822 = vsub.f32 0.0, %v758
  %v823 = vsub.f32 0.0, %v759
  %v824 = vsub.f32 0.0, %v760
  %v825 = vsub.f32 0.0, %v761
  %v826 = vsub.f32 0.0, %v762
  %v827 = vsub.f32 0.0, %v763
  %v828 = vsub.f32 0.0, %v764
  %v829 = vsub.f32 0.0, %v765
  %v830 = vsub.f32 0.0, %v766
  %v831 = vsub.f32 0.0, %v767
  %v832 = vsub.f32 0.0, %v768
  %v833 = vsub.f32 0.0, %v769
  %v834 = vsub.f32 0.0, %v770
  %v835 = vsub.f32 0.0, %v771
  %v836 = vsub.f32 0.0, %v772
  %v837 = vsub.f32 0.0, %v773
  %v838 = vsub.f32 0.0, %v774
  %v839 = vmul.f32 %v775, 1.442695
  %v840 = vpow.pop %v839
  %v841 = vmul.f32 %v776, 1.442695
  %v842 = vpow.pop %v841
  %v843 = vmul.f32 %v777, 1.442695
  %v844 = vpow.pop %v843
  %v845 = vmul.f32 %v778, 1.442695
  %v846 = vpow.pop %v845
  %v847 = vmul.f32 %v779, 1.442695
  %v848 = vpow.pop %v847
  %v849 = vmul.f32 %v780, 1.442695
  %v850 = vpow.pop %v849
  %v851 = vmul.f32 %v781, 1.442695
  %v852 = vpow.pop %v851
  %v853 = vmul.f32 %v782, 1.442695
  %v854 = vpow.pop %v853
  %v855 = vmul.f32 %v783, 1.442695
  %v856 = vpow.pop %v855
  %v857 = vmul.f32 %v784, 1.442695
  %v858 = vpow.pop %v857
  %v859 = vmul.f32 %v785, 1.442695
  %v860 = vpow.pop %v859
  %v861 = vmul.f32 %v786, 1.442695
  %v862 = vpow.pop %v861
  %v863 = vmul.f32 %v787, 1.442695
  %v864 = vpow.pop %v863
  %v865 = vmul.f32 %v788, 1.442695
  %v866 = vpow.pop %v865
  %v867 = vmul.f32 %v789, 1.442695
  %v868 = vpow.pop %v867
  %v869 = vmul.f32 %v790, 1.442695
  %v870 = vpow.pop %v869
  %v871 = vmul.f32 %v791, 1.442695
  %v872 = vpow.pop %v871
  %v873 = vmul.f32 %v792, 1.442695
  %v874 = vpow.pop %v873
  %v875 = vmul.f32 %v793, 1.442695
  %v876 = vpow.pop %v875
  %v877 = vmul.f32 %v794, 1.442695
  %v878 = vpow.pop %v877
  %v879 = vmul.f32 %v795, 1.442695
  %v880 = vpow.pop %v879
  %v881 = vmul.f32 %v796, 1.442695
  %v882 = vpow.pop %v881
  %v883 = vmul.f32 %v797, 1.442695
  %v884 = vpow.pop %v883
  %v885 = vmul.f32 %v798, 1.442695
  %v886 = vpow.pop %v885
  %v887 = vmul.f32 %v799, 1.442695
  %v888 = vpow.pop %v887
  %v889 = vmul.f32 %v800, 1.442695
  %v890 = vpow.pop %v889
  %v891 = vmul.f32 %v801, 1.442695
  %v892 = vpow.pop %v891
  %v893 = vmul.f32 %v802, 1.442695
  %v894 = vpow.pop %v893
  %v895 = vmul.f32 %v803, 1.442695
  %v896 = vpow.pop %v895
  %v897 = vmul.f32 %v804, 1.442695
  %v898 = vpow.pop %v897
  %v899 = vmul.f32 %v805, 1.442695
  %v900 = vpow.pop %v899
  %v901 = vmul.f32 %v806, 1.442695
  %v902 = vpow.pop %v901
  %v903 = vmul.f32 %v807, 1.442695
  %v904 = vpow.pop %v903
  %v905 = vmul.f32 %v808, 1.442695
  %v906 = vpow.pop %v905
  %v907 = vmul.f32 %v809, 1.442695
  %v908 = vpow.pop %v907
  %v909 = vmul.f32 %v810, 1.442695
  %v910 = vpow.pop %v909
  %v911 = vmul.f32 %v811, 1.442695
  %v912 = vpow.pop %v911
  %v913 = vmul.f32 %v812, 1.442695
  %v914 = vpow.pop %v913
  %v915 = vmul.f32 %v813, 1.442695
  %v916 = vpow.pop %v915
  %v917 = vmul.f32 %v814, 1.442695
  %v918 = vpow.pop %v917
  %v919 = vmul.f32 %v815, 1.442695
  %v920 = vpow.pop %v919
  %v921 = vmul.f32 %v816, 1.442695
  %v922 = vpow.pop %v921
  %v923 = vmul.f32 %v817, 1.442695
  %v924 = vpow.pop %v923
  %v925 = vmul.f32 %v818, 1.442695
  %v926 = vpow.pop %v925
  %v927 = vmul.f32 %v819, 1.442695
  %v928 = vpow.pop %v927
  %v929 = vmul.f32 %v820, 1.442695
  %v930 = vpow.pop %v929
  %v931 = vmul.f32 %v821, 1.442695
  %v932 = vpow.pop %v931
  %v933 = vmul.f32 %v822, 1.442695
  %v934 = vpow.pop %v933
  %v935 = vmul.f32 %v823, 1.442695
  %v936 = vpow.pop %v935
  %v937 = vmul.f32 %v824, 1.442695
  %v938 = vpow.pop %v937
  %v939 = vmul.f32 %v825, 1.442695
  %v940 = vpow.pop %v939
  %v941 = vmul.f32 %v826, 1.442695
  %v942 = vpow.pop %v941
  %v943 = vmul.f32 %v827, 1.442695
  %v944 = vpow.pop %v943
  %v945 = vmul.f32 %v828, 1.442695
  %v946 = vpow.pop %v945
  %v947 = vmul.f32 %v829, 1.442695
  %v948 = vpow.pop %v947
  %v949 = vmul.f32 %v830, 1.442695
  %v950 = vpow.pop %v949
  %v951 = vmul.f32 %v831, 1.442695
  %v952 = vpow.pop %v951
  %v953 = vmul.f32 %v832, 1.442695
  %v954 = vpow.pop %v953
  %v955 = vmul.f32 %v833, 1.442695
  %v956 = vpow.pop %v955
  %v957 = vmul.f32 %v834, 1.442695
  %v958 = vpow.pop %v957
  %v959 = vmul.f32 %v835, 1.442695
  %v960 = vpow.pop %v959
  %v961 = vmul.f32 %v836, 1.442695
  %v962 = vpow.pop %v961
  %v963 = vmul.f32 %v837, 1.442695
  %v964 = vpow.pop %v963
  %v965 = vmul.f32 %v838, 1.442695
  %v966 = vpow.pop %v965
  %v967 = vadd.f32 %v840, 1.0
  %v968 = vadd.f32 %v842, 1.0
  %v969 = vadd.f32 %v844, 1.0
  %v970 = vadd.f32 %v846, 1.0
  %v971 = vadd.f32 %v848, 1.0
  %v972 = vadd.f32 %v850, 1.0
  %v973 = vadd.f32 %v852, 1.0
  %v974 = vadd.f32 %v854, 1.0
  %v975 = vadd.f32 %v856, 1.0
  %v976 = vadd.f32 %v858, 1.0
  %v977 = vadd.f32 %v860, 1.0
  %v978 = vadd.f32 %v862, 1.0
  %v979 = vadd.f32 %v864, 1.0
  %v980 = vadd.f32 %v866, 1.0
  %v981 = vadd.f32 %v868, 1.0
  %v982 = vadd.f32 %v870, 1.0
  %v983 = vadd.f32 %v872, 1.0
  %v984 = vadd.f32 %v874, 1.0
  %v985 = vadd.f32 %v876, 1.0
  %v986 = vadd.f32 %v878, 1.0
  %v987 = vadd.f32 %v880, 1.0
  %v988 = vadd.f32 %v882, 1.0
  %v989 = vadd.f32 %v884, 1.0
  %v990 = vadd.f32 %v886, 1.0
  %v991 = vadd.f32 %v888, 1.0
  %v992 = vadd.f32 %v890, 1.0
  %v993 = vadd.f32 %v892, 1.0
  %v994 = vadd.f32 %v894, 1.0
  %v995 = vadd.f32 %v896, 1.0
  %v996 = vadd.f32 %v898, 1.0
  %v997 = vadd.f32 %v900, 1.0
  %v998 = vadd.f32 %v902, 1.0
  %v999 = vadd.f32 %v904, 1.0
  %v1000 = vadd.f32 %v906, 1.0
  %v1001 = vadd.f32 %v908, 1.0
  %v1002 = vadd.f32 %v910, 1.0
  %v1003 = vadd.f32 %v912, 1.0
  %v1004 = vadd.f32 %v914, 1.0
  %v1005 = vadd.f32 %v916, 1.0
  %v1006 = vadd.f32 %v918, 1.0
  %v1007 = vadd.f32 %v920, 1.0
  %v1008 = vadd.f32 %v922, 1.0
  %v1009 = vadd.f32 %v924, 1.0
  %v1010 = vadd.f32 %v926, 1.0
  %v1011 = vadd.f32 %v928, 1.0
  %v1012 = vadd.f32 %v930, 1.0
  %v1013 = vadd.f32 %v932, 1.0
  %v1014 = vadd.f32 %v934, 1.0
  %v1015 = vadd.f32 %v936, 1.0
  %v1016 = vadd.f32 %v938, 1.0
  %v1017 = vadd.f32 %v940, 1.0
  %v1018 = vadd.f32 %v942, 1.0
  %v1019 = vadd.f32 %v944, 1.0
  %v1020 = vadd.f32 %v946, 1.0
  %v1021 = vadd.f32 %v948, 1.0
  %v1022 = vadd.f32 %v950, 1.0
  %v1023 = vadd.f32 %v952, 1.0
  %v1024 = vadd.f32 %v954, 1.0
  %v1025 = vadd.f32 %v956, 1.0
  %v1026 = vadd.f32 %v958, 1.0
  %v1027 = vadd.f32 %v960, 1.0
  %v1028 = vadd.f32 %v962, 1.0
  %v1029 = vadd.f32 %v964, 1.0
  %v1030 = vadd.f32 %v966, 1.0
  %v1031 = vrcp.pop %v967
  %v1032 = vrcp.pop %v968
  %v1033 = vrcp.pop %v969
  %v1034 = vrcp.pop %v970
  %v1035 = vrcp.pop %v971
  %v1036 = vrcp.pop %v972
  %v1037 = vrcp.pop %v973
  %v1038 = vrcp.pop %v974
  %v1039 = vrcp.pop %v975
  %v1040 = vrcp.pop %v976
  %v1041 = vrcp.pop %v977
  %v1042 = vrcp.pop %v978
  %v1043 = vrcp.pop %v979
  %v1044 = vrcp.pop %v980
  %v1045 = vrcp.pop %v981
  %v1046 = vrcp.pop %v982
  %v1047 = vrcp.pop %v983
  %v1048 = vrcp.pop %v984
  %v1049 = vrcp.pop %v985
  %v1050 = vrcp.pop %v986
  %v1051 = vrcp.pop %v987
  %v1052 = vrcp.pop %v988
  %v1053 = vrcp.pop %v989
  %v1054 = vrcp.pop %v990
  %v1055 = vrcp.pop %v991
  %v1056 = vrcp.pop %v992
  %v1057 = vrcp.pop %v993
  %v1058 = vrcp.pop %v994
  %v1059 = vrcp.pop %v995
  %v1060 = vrcp.pop %v996
  %v1061 = vrcp.pop %v997
  %v1062 = vrcp.pop %v998
  %v1063 = vrcp.pop %v999
  %v1064 = vrcp.pop %v1000
  %v1065 = vrcp.pop %v1001
  %v1066 = vrcp.pop %v1002
  %v1067 = vrcp.pop %v1003
  %v1068 = vrcp.pop %v1004
  %v1069 = vrcp.pop %v1005
  %v1070 = vrcp.pop %v1006
  %v1071 = vrcp.pop %v1007
  %v1072 = vrcp.pop %v1008
  %v1073 = vrcp.pop %v1009
  %v1074 = vrcp.pop %v1010
  %v1075 = vrcp.pop %v1011
  %v1076 = vrcp.pop %v1012
  %v1077 = vrcp.pop %v1013
  %v1078 = vrcp.pop %v1014
  %v1079 = vrcp.pop %v1015
  %v1080 = vrcp.pop %v1016
  %v1081 = vrcp.pop %v1017
  %v1082 = vrcp.pop %v1018
  %v1083 = vrcp.pop %v1019
  %v1084 = vrcp.pop %v1020
  %v1085 = vrcp.pop %v1021
  %v1086 = vrcp.pop %v1022
  %v1087 = vrcp.pop %v1023
  %v1088 = vrcp.pop %v1024
  %v1089 = vrcp.pop %v1025
  %v1090 = vrcp.pop %v1026
  %v1091 = vrcp.pop %v1027
  %v1092 = vrcp.pop %v1028
  %v1093 = vrcp.pop %v1029
  %v1094 = vrcp.pop %v1030
  %v1095 = vmul.f32 %v711, %v1031
  %v1096 = vmul.f32 %v712, %v1032
  %v1097 = vmul.f32 %v713, %v1033
  %v1098 = vmul.f32 %v714, %v1034
  %v1099 = vmul.f32 %v715, %v1035
  %v1100 = vmul.f32 %v716, %v1036
  %v1101 = vmul.f32 %v717, %v1037
  %v1102 = vmul.f32 %v718, %v1038
  %v1103 = vmul.f32 %v719, %v1039
  %v1104 = vmul.f32 %v720, %v1040
  %v1105 = vmul.f32 %v721, %v1041
  %v1106 = vmul.f32 %v722, %v1042
  %v1107 = vmul.f32 %v723, %v1043
  %v1108 = vmul.f32 %v724, %v1044
  %v1109 = vmul.f32 %v725, %v1045
  %v1110 = vmul.f32 %v726, %v1046
  %v1111 = vmul.f32 %v727, %v1047
  %v1112 = vmul.f32 %v728, %v1048
  %v1113 = vmul.f32 %v729, %v1049
  %v1114 = vmul.f32 %v730, %v1050
  %v1115 = vmul.f32 %v731, %v1051
  %v1116 = vmul.f32 %v732, %v1052
  %v1117 = vmul.f32 %v733, %v1053
  %v1118 = vmul.f32 %v734, %v1054
  %v1119 = vmul.f32 %v735, %v1055
  %v1120 = vmul.f32 %v736, %v1056
  %v1121 = vmul.f32 %v737, %v1057
  %v1122 = vmul.f32 %v738, %v1058
  %v1123 = vmul.f32 %v739, %v1059
  %v1124 = vmul.f32 %v740, %v1060
  %v1125 = vmul.f32 %v741, %v1061
  %v1126 = vmul.f32 %v742, %v1062
  %v1127 = vmul.f32 %v743, %v1063
  %v1128 = vmul.f32 %v744, %v1064
  %v1129 = vmul.f32 %v745, %v1065
  %v1130 = vmul.f32 %v746, %v1066
  %v1131 = vmul.f32 %v747, %v1067
  %v1132 = vmul.f32 %v748, %v1068
  %v1133 = vmul.f32 %v749, %v1069
  %v1134 = vmul.f32 %v750, %v1070
  %v1135 = vmul.f32 %v751, %v1071
  %v1136 = vmul.f32 %v752, %v1072
  %v1137 = vmul.f32 %v753, %v1073
  %v1138 = vmul.f32 %v754, %v1074
  %v1139 = vmul.f32 %v755, %v1075
  %v1140 = vmul.f32 %v756, %v1076
  %v1141 = vmul.f32 %v757, %v1077
  %v1142 = vmul.f32 %v758, %v1078
  %v1143 = vmul.f32 %v759, %v1079
  %v1144 = vmul.f32 %v760, %v1080
  %v1145 = vmul.f32 %v761, %v1081
  %v1146 = vmul.f32 %v762, %v1082
  %v1147 = vmul.f32 %v763, %v1083
  %v1148 = vmul.f32 %v764, %v1084
  %v1149 = vmul.f32 %v765, %v1085
  %v1150 = vmul.f32 %v766, %v1086
  %v1151 = vmul.f32 %v767, %v1087
  %v1152 = vmul.f32 %v768, %v1088
  %v1153 = vmul.f32 %v769, %v1089
  %v1154 = vmul.f32 %v770, %v1090
  %v1155 = vmul.f32 %v771, %v1091
  %v1156 = vmul.f32 %v772, %v1092
  %v1157 = vmul.f32 %v773, %v1093
  %v1158 = vmul.f32 %v774, %v1094
  %v1159 = vpack.c.bf16 %v1096, %v1095
  %v1160 = vpack.c.bf16 %v1098, %v1097
  %v1161 = vpack.c.bf16 %v1100, %v1099
  %v1162 = vpack.c.bf16 %v1102, %v1101
  %v1163 = vpack.c.bf16 %v1104, %v1103
  %v1164 = vpack.c.bf16 %v1106, %v1105
  %v1165 = vpack.c.bf16 %v1108, %v1107
  %v1166 = vpack.c.bf16 %v1110, %v1109
  %v1167 = vpack.c.bf16 %v1112, %v1111
  %v1168 = vpack.c.bf16 %v1114, %v1113
  %v1169 = vpack.c.bf16 %v1116, %v1115
  %v1170 = vpack.c.bf16 %v1118, %v1117
  %v1171 = vpack.c.bf16 %v1120, %v1119
  %v1172 = vpack.c.bf16 %v1122, %v1121
  %v1173 = vpack.c.bf16 %v1124, %v1123
  %v1174 = vpack.c.bf16 %v1126, %v1125
  %v1175 = vpack.c.bf16 %v1128, %v1127
  %v1176 = vpack.c.bf16 %v1130, %v1129
  %v1177 = vpack.c.bf16 %v1132, %v1131
  %v1178 = vpack.c.bf16 %v1134, %v1133
  %v1179 = vpack.c.bf16 %v1136, %v1135
  %v1180 = vpack.c.bf16 %v1138, %v1137
  %v1181 = vpack.c.bf16 %v1140, %v1139
  %v1182 = vpack.c.bf16 %v1142, %v1141
  %v1183 = vpack.c.bf16 %v1144, %v1143
  %v1184 = vpack.c.bf16 %v1146, %v1145
  %v1185 = vpack.c.bf16 %v1148, %v1147
  %v1186 = vpack.c.bf16 %v1150, %v1149
  %v1187 = vpack.c.bf16 %v1152, %v1151
  %v1188 = vpack.c.bf16 %v1154, %v1153
  %v1189 = vpack.c.bf16 %v1156, %v1155
  %v1190 = vpack.c.bf16 %v1158, %v1157
  %v1223 = vunpack.c.l.b16 %v1159
  %v1224 = vunpack.c.h.b16 %v1159
  %v1225 = vunpack.c.l.b16 %v1160
  %v1226 = vunpack.c.h.b16 %v1160
  %v1227 = vunpack.c.l.b16 %v1161
  %v1228 = vunpack.c.h.b16 %v1161
  %v1229 = vunpack.c.l.b16 %v1162
  %v1230 = vunpack.c.h.b16 %v1162
  %v1231 = vunpack.c.l.b16 %v1163
  %v1232 = vunpack.c.h.b16 %v1163
  %v1233 = vunpack.c.l.b16 %v1164
  %v1234 = vunpack.c.h.b16 %v1164
  %v1235 = vunpack.c.l.b16 %v1165
  %v1236 = vunpack.c.h.b16 %v1165
  %v1237 = vunpack.c.l.b16 %v1166
  %v1238 = vunpack.c.h.b16 %v1166
  %v1239 = vunpack.c.l.b16 %v1167
  %v1240 = vunpack.c.h.b16 %v1167
  %v1241 = vunpack.c.l.b16 %v1168
  %v1242 = vunpack.c.h.b16 %v1168
  %v1243 = vunpack.c.l.b16 %v1169
  %v1244 = vunpack.c.h.b16 %v1169
  %v1245 = vunpack.c.l.b16 %v1170
  %v1246 = vunpack.c.h.b16 %v1170
  %v1247 = vunpack.c.l.b16 %v1171
  %v1248 = vunpack.c.h.b16 %v1171
  %v1249 = vunpack.c.l.b16 %v1172
  %v1250 = vunpack.c.h.b16 %v1172
  %v1251 = vunpack.c.l.b16 %v1173
  %v1252 = vunpack.c.h.b16 %v1173
  %v1253 = vunpack.c.l.b16 %v1174
  %v1254 = vunpack.c.h.b16 %v1174
  %v1255 = vunpack.c.l.b16 %v1175
  %v1256 = vunpack.c.h.b16 %v1175
  %v1257 = vunpack.c.l.b16 %v1176
  %v1258 = vunpack.c.h.b16 %v1176
  %v1259 = vunpack.c.l.b16 %v1177
  %v1260 = vunpack.c.h.b16 %v1177
  %v1261 = vunpack.c.l.b16 %v1178
  %v1262 = vunpack.c.h.b16 %v1178
  %v1263 = vunpack.c.l.b16 %v1179
  %v1264 = vunpack.c.h.b16 %v1179
  %v1265 = vunpack.c.l.b16 %v1180
  %v1266 = vunpack.c.h.b16 %v1180
  %v1267 = vunpack.c.l.b16 %v1181
  %v1268 = vunpack.c.h.b16 %v1181
  %v1269 = vunpack.c.l.b16 %v1182
  %v1270 = vunpack.c.h.b16 %v1182
  %v1271 = vunpack.c.l.b16 %v1183
  %v1272 = vunpack.c.h.b16 %v1183
  %v1273 = vunpack.c.l.b16 %v1184
  %v1274 = vunpack.c.h.b16 %v1184
  %v1275 = vunpack.c.l.b16 %v1185
  %v1276 = vunpack.c.h.b16 %v1185
  %v1277 = vunpack.c.l.b16 %v1186
  %v1278 = vunpack.c.h.b16 %v1186
  %v1279 = vunpack.c.l.b16 %v1187
  %v1280 = vunpack.c.h.b16 %v1187
  %v1281 = vunpack.c.l.b16 %v1188
  %v1282 = vunpack.c.h.b16 %v1188
  %v1283 = vunpack.c.l.b16 %v1189
  %v1284 = vunpack.c.h.b16 %v1189
  %v1285 = vunpack.c.l.b16 %v1190
  %v1286 = vunpack.c.h.b16 %v1190
  %v1287 = vpack.c.b16 %v1223, %v1223
  %v1288 = vpack.c.b16 %v1224, %v1224
  %v1289 = vpack.c.b16 %v1225, %v1225
  %v1290 = vpack.c.b16 %v1226, %v1226
  %v1291 = vpack.c.b16 %v1227, %v1227
  %v1292 = vpack.c.b16 %v1228, %v1228
  %v1293 = vpack.c.b16 %v1229, %v1229
  %v1294 = vpack.c.b16 %v1230, %v1230
  %v1295 = vpack.c.b16 %v1231, %v1231
  %v1296 = vpack.c.b16 %v1232, %v1232
  %v1297 = vpack.c.b16 %v1233, %v1233
  %v1298 = vpack.c.b16 %v1234, %v1234
  %v1299 = vpack.c.b16 %v1235, %v1235
  %v1300 = vpack.c.b16 %v1236, %v1236
  %v1301 = vpack.c.b16 %v1237, %v1237
  %v1302 = vpack.c.b16 %v1238, %v1238
  %v1303 = vpack.c.b16 %v1239, %v1239
  %v1304 = vpack.c.b16 %v1240, %v1240
  %v1305 = vpack.c.b16 %v1241, %v1241
  %v1306 = vpack.c.b16 %v1242, %v1242
  %v1307 = vpack.c.b16 %v1243, %v1243
  %v1308 = vpack.c.b16 %v1244, %v1244
  %v1309 = vpack.c.b16 %v1245, %v1245
  %v1310 = vpack.c.b16 %v1246, %v1246
  %v1311 = vpack.c.b16 %v1247, %v1247
  %v1312 = vpack.c.b16 %v1248, %v1248
  %v1313 = vpack.c.b16 %v1249, %v1249
  %v1314 = vpack.c.b16 %v1250, %v1250
  %v1315 = vpack.c.b16 %v1251, %v1251
  %v1316 = vpack.c.b16 %v1252, %v1252
  %v1317 = vpack.c.b16 %v1253, %v1253
  %v1318 = vpack.c.b16 %v1254, %v1254
  %v1319 = vpack.c.b16 %v1255, %v1255
  %v1320 = vpack.c.b16 %v1256, %v1256
  %v1321 = vpack.c.b16 %v1257, %v1257
  %v1322 = vpack.c.b16 %v1258, %v1258
  %v1323 = vpack.c.b16 %v1259, %v1259
  %v1324 = vpack.c.b16 %v1260, %v1260
  %v1325 = vpack.c.b16 %v1261, %v1261
  %v1326 = vpack.c.b16 %v1262, %v1262
  %v1327 = vpack.c.b16 %v1263, %v1263
  %v1328 = vpack.c.b16 %v1264, %v1264
  %v1329 = vpack.c.b16 %v1265, %v1265
  %v1330 = vpack.c.b16 %v1266, %v1266
  %v1331 = vpack.c.b16 %v1267, %v1267
  %v1332 = vpack.c.b16 %v1268, %v1268
  %v1333 = vpack.c.b16 %v1269, %v1269
  %v1334 = vpack.c.b16 %v1270, %v1270
  %v1335 = vpack.c.b16 %v1271, %v1271
  %v1336 = vpack.c.b16 %v1272, %v1272
  %v1337 = vpack.c.b16 %v1273, %v1273
  %v1338 = vpack.c.b16 %v1274, %v1274
  %v1339 = vpack.c.b16 %v1275, %v1275
  %v1340 = vpack.c.b16 %v1276, %v1276
  %v1341 = vpack.c.b16 %v1277, %v1277
  %v1342 = vpack.c.b16 %v1278, %v1278
  %v1343 = vpack.c.b16 %v1279, %v1279
  %v1344 = vpack.c.b16 %v1280, %v1280
  %v1345 = vpack.c.b16 %v1281, %v1281
  %v1346 = vpack.c.b16 %v1282, %v1282
  %v1347 = vpack.c.b16 %v1283, %v1283
  %v1348 = vpack.c.b16 %v1284, %v1284
  %v1349 = vpack.c.b16 %v1285, %v1285
  %v1350 = vpack.c.b16 %v1286, %v1286
  %vm1415 = vcmask 27648
  %1416 = vst.msk [vmem:[%s4] sm:$0xf] %vm1415, %v1287
  %1417 = vst.msk [vmem:[%s4 + $0x4] sm:$0xf] %vm1415, %v1288
  %1418 = vst.msk [vmem:[%s4 + $0x8] sm:$0xf] %vm1415, %v1289
  %1419 = vst.msk [vmem:[%s4 + $0xc] sm:$0xf] %vm1415, %v1290
  %1420 = vst.msk [vmem:[%s4 + $0x10] sm:$0xf] %vm1415, %v1291
  %1421 = vst.msk [vmem:[%s4 + $0x14] sm:$0xf] %vm1415, %v1292
  %1422 = vst.msk [vmem:[%s4 + $0x18] sm:$0xf] %vm1415, %v1293
  %1423 = vst.msk [vmem:[%s4 + $0x1c] sm:$0xf] %vm1415, %v1294
  %1424 = vst.msk [vmem:[%s4 + $0x20] sm:$0xf] %vm1415, %v1295
  %1425 = vst.msk [vmem:[%s4 + $0x24] sm:$0xf] %vm1415, %v1296
  %1426 = vst.msk [vmem:[%s4 + $0x28] sm:$0xf] %vm1415, %v1297
  %1427 = vst.msk [vmem:[%s4 + $0x2c] sm:$0xf] %vm1415, %v1298
  %1428 = vst.msk [vmem:[%s4 + $0x30] sm:$0xf] %vm1415, %v1299
  %1429 = vst.msk [vmem:[%s4 + $0x34] sm:$0xf] %vm1415, %v1300
  %1430 = vst.msk [vmem:[%s4 + $0x38] sm:$0xf] %vm1415, %v1301
  %1431 = vst.msk [vmem:[%s4 + $0x3c] sm:$0xf] %vm1415, %v1302
  %1432 = vst.msk [vmem:[%s4 + $0x40] sm:$0xf] %vm1415, %v1303
  %1433 = vst.msk [vmem:[%s4 + $0x44] sm:$0xf] %vm1415, %v1304
  %1434 = vst.msk [vmem:[%s4 + $0x48] sm:$0xf] %vm1415, %v1305
  %1435 = vst.msk [vmem:[%s4 + $0x4c] sm:$0xf] %vm1415, %v1306
  %1436 = vst.msk [vmem:[%s4 + $0x50] sm:$0xf] %vm1415, %v1307
  %1437 = vst.msk [vmem:[%s4 + $0x54] sm:$0xf] %vm1415, %v1308
  %1438 = vst.msk [vmem:[%s4 + $0x58] sm:$0xf] %vm1415, %v1309
  %1439 = vst.msk [vmem:[%s4 + $0x5c] sm:$0xf] %vm1415, %v1310
  %1440 = vst.msk [vmem:[%s4 + $0x60] sm:$0xf] %vm1415, %v1311
  %1441 = vst.msk [vmem:[%s4 + $0x64] sm:$0xf] %vm1415, %v1312
  %1442 = vst.msk [vmem:[%s4 + $0x68] sm:$0xf] %vm1415, %v1313
  %1443 = vst.msk [vmem:[%s4 + $0x6c] sm:$0xf] %vm1415, %v1314
  %1444 = vst.msk [vmem:[%s4 + $0x70] sm:$0xf] %vm1415, %v1315
  %1445 = vst.msk [vmem:[%s4 + $0x74] sm:$0xf] %vm1415, %v1316
  %1446 = vst.msk [vmem:[%s4 + $0x78] sm:$0xf] %vm1415, %v1317
  %1447 = vst.msk [vmem:[%s4 + $0x7c] sm:$0xf] %vm1415, %v1318
  %1448 = vst.msk [vmem:[%s4 + $0x80] sm:$0xf] %vm1415, %v1319
  %1449 = vst.msk [vmem:[%s4 + $0x84] sm:$0xf] %vm1415, %v1320
  %1450 = vst.msk [vmem:[%s4 + $0x88] sm:$0xf] %vm1415, %v1321
  %1451 = vst.msk [vmem:[%s4 + $0x8c] sm:$0xf] %vm1415, %v1322
  %1452 = vst.msk [vmem:[%s4 + $0x90] sm:$0xf] %vm1415, %v1323
  %1453 = vst.msk [vmem:[%s4 + $0x94] sm:$0xf] %vm1415, %v1324
  %1454 = vst.msk [vmem:[%s4 + $0x98] sm:$0xf] %vm1415, %v1325
  %1455 = vst.msk [vmem:[%s4 + $0x9c] sm:$0xf] %vm1415, %v1326
  %1456 = vst.msk [vmem:[%s4 + $0xa0] sm:$0xf] %vm1415, %v1327
  %1457 = vst.msk [vmem:[%s4 + $0xa4] sm:$0xf] %vm1415, %v1328
  %1458 = vst.msk [vmem:[%s4 + $0xa8] sm:$0xf] %vm1415, %v1329
  %1459 = vst.msk [vmem:[%s4 + $0xac] sm:$0xf] %vm1415, %v1330
  %1460 = vst.msk [vmem:[%s4 + $0xb0] sm:$0xf] %vm1415, %v1331
  %1461 = vst.msk [vmem:[%s4 + $0xb4] sm:$0xf] %vm1415, %v1332
  %1462 = vst.msk [vmem:[%s4 + $0xb8] sm:$0xf] %vm1415, %v1333
  %1463 = vst.msk [vmem:[%s4 + $0xbc] sm:$0xf] %vm1415, %v1334
  %1464 = vst.msk [vmem:[%s4 + $0xc0] sm:$0xf] %vm1415, %v1335
  %1465 = vst.msk [vmem:[%s4 + $0xc4] sm:$0xf] %vm1415, %v1336
  %1466 = vst.msk [vmem:[%s4 + $0xc8] sm:$0xf] %vm1415, %v1337
  %1467 = vst.msk [vmem:[%s4 + $0xcc] sm:$0xf] %vm1415, %v1338
  %1468 = vst.msk [vmem:[%s4 + $0xd0] sm:$0xf] %vm1415, %v1339
  %1469 = vst.msk [vmem:[%s4 + $0xd4] sm:$0xf] %vm1415, %v1340
  %1470 = vst.msk [vmem:[%s4 + $0xd8] sm:$0xf] %vm1415, %v1341
  %1471 = vst.msk [vmem:[%s4 + $0xdc] sm:$0xf] %vm1415, %v1342
  %1472 = vst.msk [vmem:[%s4 + $0xe0] sm:$0xf] %vm1415, %v1343
  %1473 = vst.msk [vmem:[%s4 + $0xe4] sm:$0xf] %vm1415, %v1344
  %1474 = vst.msk [vmem:[%s4 + $0xe8] sm:$0xf] %vm1415, %v1345
  %1475 = vst.msk [vmem:[%s4 + $0xec] sm:$0xf] %vm1415, %v1346
  %1476 = vst.msk [vmem:[%s4 + $0xf0] sm:$0xf] %vm1415, %v1347
  %1477 = vst.msk [vmem:[%s4 + $0xf4] sm:$0xf] %vm1415, %v1348
  %1478 = vst.msk [vmem:[%s4 + $0xf8] sm:$0xf] %vm1415, %v1349
  %1479 = vst.msk [vmem:[%s4 + $0xfc] sm:$0xf] %vm1415, %v1350
  // Predicated region
  $region18: #{tpu_custom_call.1} parent=0 // pred_check
    _
  $region19: #{tpu_custom_call.1} parent=0 // pred_check_branch
    %1481 = sbr.rel (0) target = $region21
  $region20: #{tpu_custom_call.1} parent=0 // pred_region
    _
  $region21: #{tpu_custom_call.1} parent=0 // pred_fallthru
    _
  // Predicated region
  $region22: #{tpu_custom_call.1} parent=0 // pred_check
    _
  $region23: #{tpu_custom_call.1} parent=0 // pred_check_branch
    %1483 = sbr.rel (0) target = $region25
  $region24: #{tpu_custom_call.1} parent=0 // pred_region
    _
  $region25: #{tpu_custom_call.1} parent=0 // pred_fallthru
    _

</llo_original>
